<compile_context>
chip_gen: v6e
topology: v6e:2x2x1
jax: 0.10.0
libtpu: 0.0.40
codegen_flags: <defaults>
</compile_context>

<pallas_src>
import jax
import jax.numpy as jnp
from jax.experimental import pallas as pl
from jax.experimental.pallas import tpu as pltpu


def _leaky_relu(x, slope=0.2):
    return jnp.where(x > 0, x, slope * x)


def _round_up(x, m):
    return ((x + m - 1) // m) * m


def _mlp_critic_kernel(obs_ref, act_ref,
                       w1o_ref, w1a_ref, b1_ref,
                       w2_ref, b2_ref,
                       w3_ref, b3_ref,
                       q_ref):
    """Fused 3-layer MLP critic head in batch-on-lanes layout.

    obs_ref: [obs_dim, TB], act_ref: [act_dim, TB]
    w*_ref : transposed weights [out_features, in_features] (bf16)
    b*_ref : [out_features, 1] (f32, broadcast over lanes)
    q_ref  : [out_dim, TB]  (lane-dense output tile)
    """
    # Cast MXU operands to bf16 in-register; accumulate in f32.
    obs = obs_ref[...].astype(jnp.bfloat16)
    act = act_ref[...].astype(jnp.bfloat16)

    # Layer 1: concat-fused matmul  W1o@obs + W1a@act + b1, LeakyReLU(0.2).
    h = jnp.dot(w1o_ref[...], obs, preferred_element_type=jnp.float32)
    h = h + jnp.dot(w1a_ref[...], act, preferred_element_type=jnp.float32)
    h = _leaky_relu(h + b1_ref[...])                     # f32 epilogue (VPU)

    # Layer 2.
    h = jnp.dot(w2_ref[...], h.astype(jnp.bfloat16),
                preferred_element_type=jnp.float32)
    h = _leaky_relu(h + b2_ref[...])

    # Output layer (out_dim = 1) -> [1, TB]: lane-dense, unmasked store.
    q = jnp.dot(w3_ref[...], h.astype(jnp.bfloat16),
                preferred_element_type=jnp.float32)
    q_ref[...] = (q + b3_ref[...]).astype(q_ref.dtype)


def _pick_batch_tile(B, batch_tile):
    """Batch tile along the lane axis.

    - B <= 128: single full-batch block (block dim == array dim, so the
      128-lane divisibility rule is satisfied trivially).
    - otherwise: 128-aligned tile, capped at `batch_tile`, and sized so the
      grid has >= 2 steps (lets the 'parallel' axis shard across v7x's 2 TCs).
    """
    if B <= 128:
        return B
    return max(128, min(batch_tile, _round_up(pl.cdiv(B, 2), 128)))


def critic_forward_bl(obs_t, act_t, params, *, batch_tile=4096):
    """Core kernel. obs_t: [obs_dim, B], act_t: [act_dim, B] (batch on lanes).

    Returns q_t: [out_dim, B] (f32).
    """
    obs_dim, B = obs_t.shape
    act_dim = act_t.shape[0]
    w1o, w1a = params["w1_obs_t"], params["w1_act_t"]
    b1, w2, b2, w3, b3 = (params[k] for k in ("b1", "w2_t", "b2", "w3_t", "b3"))
    hidden = w1o.shape[0]
    out_dim = w3.shape[0]

    TB = _pick_batch_tile(B, batch_tile)
    grid = (pl.cdiv(B, TB),)

    # Weights / biases: whole-array blocks, constant index_map -> VMEM-resident.
    def resident(arr):
        nd = arr.ndim
        return pl.BlockSpec(arr.shape, lambda i, _nd=nd: (0,) * _nd)

    # Activations: tile the lane (batch) axis only.
    def batched(feat):
        return pl.BlockSpec((feat, TB), lambda i: (0, i))

    din = obs_dim + act_dim
    cost = pl.CostEstimate(
        flops=2 * B * (din * hidden + hidden * hidden + hidden * out_dim),
        transcendentals=0,
        bytes_accessed=int(obs_t.nbytes + act_t.nbytes + B * out_dim * 4
                           + w1o.nbytes + w1a.nbytes + w2.nbytes + w3.nbytes
                           + b1.nbytes + b2.nbytes + b3.nbytes),
    )

    q_t = pl.pallas_call(
        _mlp_critic_kernel,
        out_shape=jax.ShapeDtypeStruct((out_dim, B), jnp.float32),
        grid_spec=pl.GridSpec(
            grid=grid,
            in_specs=[
                batched(obs_dim),
                batched(act_dim),
                resident(w1o), resident(w1a), resident(b1),
                resident(w2), resident(b2),
                resident(w3), resident(b3),
            ],
            out_specs=pl.BlockSpec((out_dim, TB), lambda i: (0, i)),
        ),
        compiler_params=pltpu.CompilerParams(
            dimension_semantics=("parallel",)),   # shards batch across TCs on v7x
        cost_estimate=cost,
    )(obs_t, act_t, w1o, w1a, b1, w2, b2, w3, b3)

    return q_t


def critic_forward(obs, actions, params, *, batch_tile=4096):
    """Module-shaped API: obs [B, obs_dim], actions [B, act_dim] -> {'q': [B, 1]}.

    NOTE: does one wrapper transpose per input to reach the kernel's
    batch-on-lanes layout; producers that already store activations
    batch-last should call critic_forward_bl directly and avoid it.
    """
    q_t = critic_forward_bl(obs.T, actions.T, params, batch_tile=batch_tile)
    return {"q": q_t.T}


def init_critic_params(key, obs_dim, action_dim, hidden=32, out_dim=1):
    """Deterministic synthetic parameter init (shapes per spirl MLPCritic).

    Weights are stored TRANSPOSED ([out_features, in_features], bf16) for the
    batch-on-lanes kernel; layer-1 is pre-split into obs / action slabs so the
    kernel fuses the input concatenation.  Biases are [out_features, 1] f32.
    """
    k1, k2, k3 = jax.random.split(key, 3)
    din = obs_dim + action_dim               # action_input=True

    def lin_t(k, fan_in, fan_out):
        w = jax.random.normal(k, (fan_out, fan_in), jnp.float32)
        w = (w * (1.0 / jnp.sqrt(jnp.float32(fan_in)))).astype(jnp.bfloat16)
        b = jnp.zeros((fan_out, 1), jnp.float32)
        return w, b

    w1_t, b1 = lin_t(k1, din, hidden)        # [H, din]
    w2_t, b2 = lin_t(k2, hidden, hidden)     # [H, H]
    w3_t, b3 = lin_t(k3, hidden, out_dim)    # [out, H]
    return {
        "w1_obs_t": w1_t[:, :obs_dim], "w1_act_t": w1_t[:, obs_dim:], "b1": b1,
        "w2_t": w2_t, "b2": b2,
        "w3_t": w3_t, "b3": b3,
    }


def _reference_forward(obs, actions, params):
    """Plain-JAX reference with identical bf16-operand / f32-accum numerics."""
    obs_t = obs.T.astype(jnp.bfloat16)
    act_t = actions.T.astype(jnp.bfloat16)
    h = (jnp.dot(params["w1_obs_t"], obs_t, preferred_element_type=jnp.float32)
         + jnp.dot(params["w1_act_t"], act_t, preferred_element_type=jnp.float32))
    h = _leaky_relu(h + params["b1"])
    h = jnp.dot(params["w2_t"], h.astype(jnp.bfloat16),
                preferred_element_type=jnp.float32)
    h = _leaky_relu(h + params["b2"])
    q = jnp.dot(params["w3_t"], h.astype(jnp.bfloat16),
                preferred_element_type=jnp.float32)
    return (q + params["b3"]).T


if __name__ == "__main__":
    key = jax.random.PRNGKey(0)
    k_obs, k_act, k_par = jax.random.split(key, 3)

    B, OBS_DIM, ACTION_DIM, HIDDEN = 2, 32, 4, 32
    obs = jax.random.normal(k_obs, (B, OBS_DIM), jnp.float32)
    actions = jax.random.normal(k_act, (B, ACTION_DIM), jnp.float32)
    params = init_critic_params(k_par, OBS_DIM, ACTION_DIM, hidden=HIDDEN, out_dim=1)

    out = critic_forward(obs, actions, params)
    q = jax.block_until_ready(out["q"])

    ref = _reference_forward(obs, actions, params)
    assert q.shape == (B, 1), q.shape
    assert jnp.allclose(q, ref, atol=2e-3, rtol=2e-3), (q, ref)

    print("KERNEL_OK")
</pallas_src>

<mosaic_0001>
module attributes {stable_mosaic.version = 11 : i64} {
  func.func @_mlp_critic_kernel(%arg0: i32, %arg1: memref<32x2xf32, #tpu.memory_space<vmem>>, %arg2: memref<4x2xf32, #tpu.memory_space<vmem>>, %arg3: memref<32x32xbf16, #tpu.memory_space<vmem>>, %arg4: memref<32x4xbf16, #tpu.memory_space<vmem>>, %arg5: memref<32x1xf32, #tpu.memory_space<vmem>>, %arg6: memref<32x32xbf16, #tpu.memory_space<vmem>>, %arg7: memref<32x1xf32, #tpu.memory_space<vmem>>, %arg8: memref<1x32xbf16, #tpu.memory_space<vmem>>, %arg9: memref<1x1xf32, #tpu.memory_space<vmem>>, %arg10: memref<1x2xf32, #tpu.memory_space<vmem>>) attributes {dimension_semantics = [#tpu.dimension_semantics<parallel>], iteration_bounds = array<i64: 1>, scalar_prefetch = 0 : i64, scratch_operands = 0 : i64, tpu.core_type = #tpu.core_type<tc>, window_params = [{transform_indices = @transform_0, window_bounds = array<i64: 32, 2>}, {transform_indices = @transform_1, window_bounds = array<i64: 4, 2>}, {pipeline_mode = #tpu.pipeline_mode<synchronous>, transform_indices = @transform_2, window_bounds = array<i64: 32, 32>}, {pipeline_mode = #tpu.pipeline_mode<synchronous>, transform_indices = @transform_3, window_bounds = array<i64: 32, 4>}, {pipeline_mode = #tpu.pipeline_mode<synchronous>, transform_indices = @transform_4, window_bounds = array<i64: 32, 1>}, {pipeline_mode = #tpu.pipeline_mode<synchronous>, transform_indices = @transform_5, window_bounds = array<i64: 32, 32>}, {pipeline_mode = #tpu.pipeline_mode<synchronous>, transform_indices = @transform_6, window_bounds = array<i64: 32, 1>}, {pipeline_mode = #tpu.pipeline_mode<synchronous>, transform_indices = @transform_7, window_bounds = array<i64: 1, 32>}, {pipeline_mode = #tpu.pipeline_mode<synchronous>, transform_indices = @transform_8, window_bounds = array<i64: 1, 1>}, {transform_indices = @transform_9, window_bounds = array<i64: 1, 2>}]} {
    %c0 = arith.constant 0 : index
    %c0_0 = arith.constant 0 : index
    %0 = vector.load %arg1[%c0, %c0_0] : memref<32x2xf32, #tpu.memory_space<vmem>>, vector<32x2xf32>
    %1 = arith.truncf %0 : vector<32x2xf32> to vector<32x2xbf16>
    %c0_1 = arith.constant 0 : index
    %c0_2 = arith.constant 0 : index
    %2 = vector.load %arg2[%c0_1, %c0_2] : memref<4x2xf32, #tpu.memory_space<vmem>>, vector<4x2xf32>
    %3 = arith.truncf %2 : vector<4x2xf32> to vector<4x2xbf16>
    %c0_3 = arith.constant 0 : index
    %c0_4 = arith.constant 0 : index
    %4 = vector.load %arg3[%c0_3, %c0_4] : memref<32x32xbf16, #tpu.memory_space<vmem>>, vector<32x32xbf16>
    %cst = arith.constant dense<0.000000e+00> : vector<32x2xf32>
    %5 = tpu.matmul %4, %1, %cst {dimension_numbers = #tpu.dot_dimension_numbers<[1], [0], [0], [1], [0, 0, 1, 1], [], []>} : vector<32x32xbf16>, vector<32x2xbf16>, vector<32x2xf32> -> vector<32x2xf32>
    %c0_5 = arith.constant 0 : index
    %c0_6 = arith.constant 0 : index
    %6 = vector.load %arg4[%c0_5, %c0_6] : memref<32x4xbf16, #tpu.memory_space<vmem>>, vector<32x4xbf16>
    %cst_7 = arith.constant dense<0.000000e+00> : vector<32x2xf32>
    %7 = tpu.matmul %6, %3, %cst_7 {dimension_numbers = #tpu.dot_dimension_numbers<[1], [0], [0], [1], [0, 0, 1, 1], [], []>} : vector<32x4xbf16>, vector<4x2xbf16>, vector<32x2xf32> -> vector<32x2xf32>
    %8 = arith.addf %5, %7 : vector<32x2xf32>
    %c0_8 = arith.constant 0 : index
    %c0_9 = arith.constant 0 : index
    %9 = vector.load %arg5[%c0_8, %c0_9] : memref<32x1xf32, #tpu.memory_space<vmem>>, vector<32x1xf32>
    %10 = vector.broadcast %9 : vector<32x1xf32> to vector<32x2xf32>
    %11 = arith.addf %8, %10 : vector<32x2xf32>
    %cst_10 = arith.constant 0.000000e+00 : f32
    %12 = vector.broadcast %cst_10 : f32 to vector<32x2xf32>
    %13 = arith.cmpf ogt, %11, %12 : vector<32x2xf32>
    %cst_11 = arith.constant 2.000000e-01 : f32
    %14 = vector.broadcast %cst_11 : f32 to vector<32x2xf32>
    %15 = arith.mulf %14, %11 : vector<32x2xf32>
    %16 = arith.select %13, %11, %15 : vector<32x2xi1>, vector<32x2xf32>
    %c0_12 = arith.constant 0 : index
    %c0_13 = arith.constant 0 : index
    %17 = vector.load %arg6[%c0_12, %c0_13] : memref<32x32xbf16, #tpu.memory_space<vmem>>, vector<32x32xbf16>
    %18 = arith.truncf %16 : vector<32x2xf32> to vector<32x2xbf16>
    %cst_14 = arith.constant dense<0.000000e+00> : vector<32x2xf32>
    %19 = tpu.matmul %17, %18, %cst_14 {dimension_numbers = #tpu.dot_dimension_numbers<[1], [0], [0], [1], [0, 0, 1, 1], [], []>} : vector<32x32xbf16>, vector<32x2xbf16>, vector<32x2xf32> -> vector<32x2xf32>
    %c0_15 = arith.constant 0 : index
    %c0_16 = arith.constant 0 : index
    %20 = vector.load %arg7[%c0_15, %c0_16] : memref<32x1xf32, #tpu.memory_space<vmem>>, vector<32x1xf32>
    %21 = vector.broadcast %20 : vector<32x1xf32> to vector<32x2xf32>
    %22 = arith.addf %19, %21 : vector<32x2xf32>
    %cst_17 = arith.constant 0.000000e+00 : f32
    %23 = vector.broadcast %cst_17 : f32 to vector<32x2xf32>
    %24 = arith.cmpf ogt, %22, %23 : vector<32x2xf32>
    %cst_18 = arith.constant 2.000000e-01 : f32
    %25 = vector.broadcast %cst_18 : f32 to vector<32x2xf32>
    %26 = arith.mulf %25, %22 : vector<32x2xf32>
    %27 = arith.select %24, %22, %26 : vector<32x2xi1>, vector<32x2xf32>
    %c0_19 = arith.constant 0 : index
    %c0_20 = arith.constant 0 : index
    %28 = vector.load %arg8[%c0_19, %c0_20] : memref<1x32xbf16, #tpu.memory_space<vmem>>, vector<1x32xbf16>
    %29 = arith.truncf %27 : vector<32x2xf32> to vector<32x2xbf16>
    %cst_21 = arith.constant dense<0.000000e+00> : vector<1x2xf32>
    %30 = tpu.matmul %28, %29, %cst_21 {dimension_numbers = #tpu.dot_dimension_numbers<[1], [0], [0], [1], [0, 0, 1, 1], [], []>} : vector<1x32xbf16>, vector<32x2xbf16>, vector<1x2xf32> -> vector<1x2xf32>
    %c0_22 = arith.constant 0 : index
    %c0_23 = arith.constant 0 : index
    %31 = vector.load %arg9[%c0_22, %c0_23] : memref<1x1xf32, #tpu.memory_space<vmem>>, vector<1x1xf32>
    %32 = vector.broadcast %31 : vector<1x1xf32> to vector<1x2xf32>
    %33 = arith.addf %30, %32 : vector<1x2xf32>
    %c0_24 = arith.constant 0 : index
    %c0_25 = arith.constant 0 : index
    %34 = vector.load %arg10[%c0_24, %c0_25] : memref<1x2xf32, #tpu.memory_space<vmem>>, vector<1x2xf32>
    tpu.vector_store %arg10[%c0_24, %c0_25], %33 {strides = array<i32>} : memref<1x2xf32, #tpu.memory_space<vmem>>, vector<1x2xf32>,
    return
  }
  func.func @transform_0(%arg0: i32) -> (i32, i32) {
    %c0_i32 = arith.constant 0 : i32
    %c0_i32_0 = arith.constant 0 : i32
    return %c0_i32, %arg0 : i32, i32
  }
  func.func @transform_1(%arg0: i32) -> (i32, i32) {
    %c0_i32 = arith.constant 0 : i32
    %c0_i32_0 = arith.constant 0 : i32
    return %c0_i32, %arg0 : i32, i32
  }
  func.func @transform_2(%arg0: i32) -> (i32, i32) {
    %c0_i32 = arith.constant 0 : i32
    %c0_i32_0 = arith.constant 0 : i32
    %c0_i32_1 = arith.constant 0 : i32
    return %c0_i32, %c0_i32_0 : i32, i32
  }
  func.func @transform_3(%arg0: i32) -> (i32, i32) {
    %c0_i32 = arith.constant 0 : i32
    %c0_i32_0 = arith.constant 0 : i32
    %c0_i32_1 = arith.constant 0 : i32
    return %c0_i32, %c0_i32_0 : i32, i32
  }
  func.func @transform_4(%arg0: i32) -> (i32, i32) {
    %c0_i32 = arith.constant 0 : i32
    %c0_i32_0 = arith.constant 0 : i32
    %c0_i32_1 = arith.constant 0 : i32
    return %c0_i32, %c0_i32_0 : i32, i32
  }
  func.func @transform_5(%arg0: i32) -> (i32, i32) {
    %c0_i32 = arith.constant 0 : i32
    %c0_i32_0 = arith.constant 0 : i32
    %c0_i32_1 = arith.constant 0 : i32
    return %c0_i32, %c0_i32_0 : i32, i32
  }
  func.func @transform_6(%arg0: i32) -> (i32, i32) {
    %c0_i32 = arith.constant 0 : i32
    %c0_i32_0 = arith.constant 0 : i32
    %c0_i32_1 = arith.constant 0 : i32
    return %c0_i32, %c0_i32_0 : i32, i32
  }
  func.func @transform_7(%arg0: i32) -> (i32, i32) {
    %c0_i32 = arith.constant 0 : i32
    %c0_i32_0 = arith.constant 0 : i32
    %c0_i32_1 = arith.constant 0 : i32
    return %c0_i32, %c0_i32_0 : i32, i32
  }
  func.func @transform_8(%arg0: i32) -> (i32, i32) {
    %c0_i32 = arith.constant 0 : i32
    %c0_i32_0 = arith.constant 0 : i32
    %c0_i32_1 = arith.constant 0 : i32
    return %c0_i32, %c0_i32_0 : i32, i32
  }
  func.func @transform_9(%arg0: i32) -> (i32, i32) {
    %c0_i32 = arith.constant 0 : i32
    %c0_i32_0 = arith.constant 0 : i32
    return %c0_i32, %arg0 : i32, i32
  }
}

</mosaic_0001>

<llo_original>
// kernel: tpu_custom_call.1
$region0: #{tpu_custom_call.1}
  #allocation0 [shape = 'u32[]', space=smem, size = 0x4, offset = 0x4, fixed_abs, tag = 'smem constant byte address 0x4 - core index']
  #allocation1 [shape = 'u32[144,128]{1,0:T(1,128)}', space=vmem, size = 0x12000, scoped, tag = 'internal scratch']
  #allocation2 [shape = 'f32[1,1]{1,0:T(1,128)S(1)}', space=vmem, size = 0x200, scoped, tag = 'scoped memory for tpu_custom_call.1']
  %s0 = inlined_call_operand.vmem [shape: f32[32,2], index: 0, kind: input, shape index: {}]
  %s1 = inlined_call_operand.vmem [shape: f32[4,2], index: 1, kind: input, shape index: {}]
  %s2 = inlined_call_operand.vmem [shape: bf16[32,32], index: 2, kind: input, shape index: {}]
  %s3 = inlined_call_operand.vmem [shape: bf16[32,4], index: 3, kind: input, shape index: {}]
  %s4 = inlined_call_operand.vmem [shape: f32[32,1], index: 4, kind: input, shape index: {}]
  %s5 = inlined_call_operand.vmem [shape: bf16[32,32], index: 5, kind: input, shape index: {}]
  %s6 = inlined_call_operand.vmem [shape: f32[32,1], index: 6, kind: input, shape index: {}]
  %s7 = inlined_call_operand.vmem [shape: bf16[1,32], index: 7, kind: input, shape index: {}]
  %s8 = inlined_call_operand.<no memory space> [shape: f32[1,1], index: 8, kind: input, shape index: {}]
  %s9 = inlined_call_operand.hbm [shape: f32[1,2], index: 9, kind: output, shape index: {}]
  %s10 = sld [smem:[#allocation0]]
  $region46: #{tpu_custom_call.1} parent=0
    _
  %s12 = ssub.s32 1, %s10
  %s13 = scalar_select 0, %s12, %s10
  %v14 = vstv %s8
  %15 = vst [vmem:[#allocation2] sm:$0x1] %v14
  $region1: #{tpu_custom_call.1} parent=0
    #allocation3 [shape = 'u8[512]{0}', space=vmem, size = 0x400, scoped, tag = 'output window, operand 0, single buffered']
    #allocation4 [shape = 's32[1]{0}', space=sflag, size = 0x4, scoped, tag = 'scoped memory for tpu_custom_call.1']
    %16 = vsyncpa [#allocation4], 0
    // Predicated region
    $region2: #{tpu_custom_call.1} parent=1 // pred_check
      _
    $region3: #{tpu_custom_call.1} parent=1 // pred_check_branch
      %18 = sbr.rel (0) target = $region5
    $region4: #{tpu_custom_call.1} parent=1 // pred_region
      _
    $region5: #{tpu_custom_call.1} parent=1 // pred_fallthru
      _
    // Predicated region
    $region6: #{tpu_custom_call.1} parent=1 // pred_check
      _
    $region7: #{tpu_custom_call.1} parent=1 // pred_check_branch
      %20 = sbr.rel (0) target = $region9
    $region8: #{tpu_custom_call.1} parent=1 // pred_region
      _
    $region9: #{tpu_custom_call.1} parent=1 // pred_fallthru
      _
    // Predicated region
    $region10: #{tpu_custom_call.1} parent=1 // pred_check
      _
    $region11: #{tpu_custom_call.1} parent=1 // pred_check_branch
      %22 = sbr.rel (0) target = $region13
    $region12: #{tpu_custom_call.1} parent=1 // pred_region
      _
    $region13: #{tpu_custom_call.1} parent=1 // pred_fallthru
      _
    // Predicated region
    $region14: #{tpu_custom_call.1} parent=1 // pred_check
      _
    $region15: #{tpu_custom_call.1} parent=1 // pred_check_branch
      %24 = sbr.rel (0) target = $region17
    $region16: #{tpu_custom_call.1} parent=1 // pred_region
      _
    $region17: #{tpu_custom_call.1} parent=1 // pred_fallthru
      _
    // Predicated region
    $region18: #{tpu_custom_call.1} parent=1 // pred_check
      _
    $region19: #{tpu_custom_call.1} parent=1 // pred_check_branch
      %26 = sbr.rel (0) target = $region21
    $region20: #{tpu_custom_call.1} parent=1 // pred_region
      _
    $region21: #{tpu_custom_call.1} parent=1 // pred_fallthru
      _
    // Predicated region
    $region22: #{tpu_custom_call.1} parent=1 // pred_check
      _
    $region23: #{tpu_custom_call.1} parent=1 // pred_check_branch
      %28 = sbr.rel (0) target = $region25
    $region24: #{tpu_custom_call.1} parent=1 // pred_region
      _
    $region25: #{tpu_custom_call.1} parent=1 // pred_fallthru
      _
    // Predicated region
    $region26: #{tpu_custom_call.1} parent=1 // pred_check
      _
    $region27: #{tpu_custom_call.1} parent=1 // pred_check_branch
      %30 = sbr.rel (0) target = $region29
    $region28: #{tpu_custom_call.1} parent=1 // pred_region
      _
    $region29: #{tpu_custom_call.1} parent=1 // pred_fallthru
      _
    // Predicated region
    $region30: #{tpu_custom_call.1} parent=1 // pred_check
      _
    $region31: #{tpu_custom_call.1} parent=1 // pred_check_branch
      %32 = sbr.rel (0) target = $region33
    $region32: #{tpu_custom_call.1} parent=1 // pred_region
      _
    $region33: #{tpu_custom_call.1} parent=1 // pred_fallthru
      _
    // Predicated region
    $region34: #{tpu_custom_call.1} parent=1 // pred_check
      _
    $region35: #{tpu_custom_call.1} parent=1 // pred_check_branch
      %34 = sbr.rel (0) target = $region37
    $region36: #{tpu_custom_call.1} parent=1 // pred_region
      _
    $region37: #{tpu_custom_call.1} parent=1 // pred_fallthru
      _
    %v36 = vld [vmem:[%s0] sm:$0xff]
    %v37 = vld [vmem:[%s0 + $0x8] sm:$0xff]
    %v38 = vld [vmem:[%s0 + $0x10] sm:$0xff]
    %v39 = vld [vmem:[%s0 + $0x18] sm:$0xff]
    %v40 = vpack.c.bf16 %v37, %v36
    %v41 = vpack.c.bf16 %v39, %v38
    %v42 = vld [vmem:[%s1] sm:$0xf]
    %v43 = vpack.c.bf16 %v42, %v42
    %v44 = vld [vmem:[%s2] sm:$0xf]
    %v45 = vld [vmem:[%s2 + $0x4] sm:$0xf]
    %v46 = vld [vmem:[%s2 + $0x8] sm:$0xf]
    %v47 = vld [vmem:[%s2 + $0xc] sm:$0xf]
    %v48 = vld [vmem:[%s3] sm:$0xf]
    %v49 = vld [vmem:[%s3 + $0x4] sm:$0xf]
    %v50 = vld [vmem:[%s3 + $0x8] sm:$0xf]
    %v51 = vld [vmem:[%s3 + $0xc] sm:$0xf]
    %v56 = vunpack.c.l.b16 %v48
    %v57 = vunpack.c.l.b16 %v49
    %v58 = vunpack.c.l.b16 %v50
    %v59 = vunpack.c.l.b16 %v51
    %v60 = vpack.c.b16 %v57, %v56
    %v61 = vpack.c.b16 %v59, %v58
    %vm62 = vcmask 31744
    %v64 = vsel %vm62, %v60, 0
    %v67 = vsel %vm62, %v61, 0
    %vm69 = vcmask 1041408
    %v71 = vsel %vm69, %v43, 0
    %73 = vmatprep.subr.bf16.mxu0 0
    %74 = vmatpush1.bf16.msra.mxu0 0
    %75 = vmatprep.subr.bf16.mxu0 0
    %76 = vmatpush1.bf16.msra.mxu0 0
    %77 = vmatprep.subr.bf16.mxu0 0
    %78 = vmatpush1.bf16.msra.mxu0 0
    %79 = vmatprep.subr.bf16.mxu0 0
    %80 = vmatpush1.bf16.msra.mxu0 0
    %81 = vmatprep.subr.bf16.mxu0 0
    %82 = vmatpush1.bf16.msra.mxu0 0
    %83 = vmatprep.subr.bf16.mxu0 0
    %84 = vmatpush1.bf16.msra.mxu0 0
    %85 = vmatprep.subr.bf16.mxu0 0
    %86 = vmatpush1.bf16.msra.mxu0 0
    %87 = vmatprep.subr.bf16.mxu0 0
    %88 = vmatpush1.bf16.msra.mxu0 %v71
    %89 = vmatprep.subr.bf16.mxu0 0
    %90 = vmatpush2.bf16.msra.mxu0 0
    %91 = vmatprep.subr.bf16.mxu0 0
    %92 = vmatpush2.bf16.msra.mxu0 0
    %93 = vmatprep.subr.bf16.mxu0 0
    %94 = vmatpush2.bf16.msra.mxu0 0
    %95 = vmatprep.subr.bf16.mxu0 0
    %96 = vmatpush2.bf16.msra.mxu0 0
    %97 = vmatprep.subr.bf16.mxu0 0
    %98 = vmatpush2.bf16.msra.mxu0 0
    %99 = vmatprep.subr.bf16.mxu0 0
    %100 = vmatpush2.bf16.msra.mxu0 0
    %101 = vmatprep.subr.bf16.mxu0 0
    %102 = vmatpush2.bf16.msra.mxu0 0
    %103 = vmatprep.subr.bf16.mxu0 0
    %104 = vmatpush2.bf16.msra.mxu0 0
    %105 = vmatprep.mubr.bf16.mxu0 0
    %106 = vmatmul.mubr.bf16.gmra.mxu0 %v64
    %v107 = vpop.f32.mrf.mxu0
    %v108 = vadd.f32 0.0, %v107
    %v109 = vpop.f32.mrf.mxu0
    %v110 = vpop.f32.mrf.mxu0
    %v111 = vadd.f32 0.0, %v110
    %v112 = vpop.f32.mrf.mxu0
    %113 = vmatprep.mubr.bf16.mxu0 0
    %114 = vmatmul.mubr.bf16.gmra.mxu0 %v67
    %v115 = vpop.f32.mrf.mxu0
    %v116 = vadd.f32 0.0, %v115
    %v117 = vpop.f32.mrf.mxu0
    %v118 = vpop.f32.mrf.mxu0
    %v119 = vadd.f32 0.0, %v118
    %v120 = vpop.f32.mrf.mxu0
    %121 = vdwg.mxu0
    %v126 = vunpack.c.l.b16 %v44
    %v127 = vunpack.c.l.b16 %v45
    %v128 = vunpack.c.l.b16 %v46
    %v129 = vunpack.c.l.b16 %v47
    %v130 = vpack.c.b16 %v127, %v126
    %v131 = vpack.c.b16 %v129, %v128
    %vm132 = vcmask 261120
    %v134 = vsel %vm132, %v130, 0
    %v137 = vsel %vm132, %v131, 0
    %139 = vmatprep.subr.bf16.mxu0 0
    %140 = vmatpush1.bf16.msra.mxu0 0
    %141 = vmatprep.subr.bf16.mxu0 0
    %142 = vmatpush1.bf16.msra.mxu0 0
    %143 = vmatprep.subr.bf16.mxu0 0
    %144 = vmatpush1.bf16.msra.mxu0 0
    %145 = vmatprep.subr.bf16.mxu0 0
    %146 = vmatpush1.bf16.msra.mxu0 0
    %147 = vmatprep.subr.bf16.mxu0 0
    %148 = vmatpush1.bf16.msra.mxu0 0
    %149 = vmatprep.subr.bf16.mxu0 0
    %150 = vmatpush1.bf16.msra.mxu0 0
    %151 = vmatprep.subr.bf16.mxu0 0
    %152 = vmatpush1.bf16.msra.mxu0 %v41
    %153 = vmatprep.subr.bf16.mxu0 0
    %154 = vmatpush1.bf16.msra.mxu0 %v40
    %155 = vmatprep.subr.bf16.mxu0 0
    %156 = vmatpush2.bf16.msra.mxu0 0
    %157 = vmatprep.subr.bf16.mxu0 0
    %158 = vmatpush2.bf16.msra.mxu0 0
    %159 = vmatprep.subr.bf16.mxu0 0
    %160 = vmatpush2.bf16.msra.mxu0 0
    %161 = vmatprep.subr.bf16.mxu0 0
    %162 = vmatpush2.bf16.msra.mxu0 0
    %163 = vmatprep.subr.bf16.mxu0 0
    %164 = vmatpush2.bf16.msra.mxu0 0
    %165 = vmatprep.subr.bf16.mxu0 0
    %166 = vmatpush2.bf16.msra.mxu0 0
    %167 = vmatprep.subr.bf16.mxu0 0
    %168 = vmatpush2.bf16.msra.mxu0 0
    %169 = vmatprep.subr.bf16.mxu0 0
    %170 = vmatpush2.bf16.msra.mxu0 0
    %171 = vmatprep.mubr.bf16.mxu0 0
    %172 = vmatmul.mubr.bf16.gmra.mxu0 %v134
    %v173 = vpop.f32.mrf.mxu0
    %v174 = vadd.f32 %v108, %v173
    %v175 = vpop.f32.mrf.mxu0
    %v176 = vpop.f32.mrf.mxu0
    %v177 = vadd.f32 %v111, %v176
    %v178 = vpop.f32.mrf.mxu0
    %179 = vmatprep.mubr.bf16.mxu0 0
    %180 = vmatmul.mubr.bf16.gmra.mxu0 %v137
    %v181 = vpop.f32.mrf.mxu0
    %v182 = vadd.f32 %v116, %v181
    %v183 = vpop.f32.mrf.mxu0
    %v184 = vpop.f32.mrf.mxu0
    %v185 = vadd.f32 %v119, %v184
    %v186 = vpop.f32.mrf.mxu0
    %187 = vdwg.mxu0
    %v188 = vld [vmem:[%s4] sm:$0xff]
    %v189 = vld [vmem:[%s4 + $0x8] sm:$0xff]
    %v190 = vld [vmem:[%s4 + $0x10] sm:$0xff]
    %v191 = vld [vmem:[%s4 + $0x18] sm:$0xff]
    %193 = vset.pattern.permute.xlu0 0
    %194 = vperm.xlu0 %193, %v188
    %v195 = vpop.permute.xlu0 %194
    %198 = vset.pattern.permute.xlu0 0
    %199 = vperm.xlu0 %198, %v189
    %v200 = vpop.permute.xlu0 %199
    %203 = vset.pattern.permute.xlu0 0
    %204 = vperm.xlu0 %203, %v190
    %v205 = vpop.permute.xlu0 %204
    %208 = vset.pattern.permute.xlu0 0
    %209 = vperm.xlu0 %208, %v191
    %v210 = vpop.permute.xlu0 %209
    %v212 = vadd.f32 %v174, %v195
    %v213 = vadd.f32 %v177, %v200
    %v214 = vadd.f32 %v182, %v205
    %v215 = vadd.f32 %v185, %v210
    %vm216 = vcmp.gt.f32.partialorder %v212, 0.0
    %vm217 = vcmp.gt.f32.partialorder %v213, 0.0
    %vm218 = vcmp.gt.f32.partialorder %v214, 0.0
    %vm219 = vcmp.gt.f32.partialorder %v215, 0.0
    %v220 = vmul.f32 %v212, 0.2
    %v221 = vmul.f32 %v213, 0.2
    %v222 = vmul.f32 %v214, 0.2
    %v223 = vmul.f32 %v215, 0.2
    %v224 = vsel %vm216, %v212, %v220
    %v225 = vsel %vm217, %v213, %v221
    %v226 = vsel %vm218, %v214, %v222
    %v227 = vsel %vm219, %v215, %v223
    %v228 = vld [vmem:[%s5] sm:$0xf]
    %v229 = vld [vmem:[%s5 + $0x4] sm:$0xf]
    %v230 = vld [vmem:[%s5 + $0x8] sm:$0xf]
    %v231 = vld [vmem:[%s5 + $0xc] sm:$0xf]
    %v232 = vpack.c.bf16 %v225, %v224
    %v233 = vpack.c.bf16 %v227, %v226
    %v234 = vld [vmem:[%s6] sm:$0xff]
    %v235 = vld [vmem:[%s6 + $0x8] sm:$0xff]
    %v236 = vld [vmem:[%s6 + $0x10] sm:$0xff]
    %v237 = vld [vmem:[%s6 + $0x18] sm:$0xff]
    %239 = vset.pattern.permute.xlu0 0
    %240 = vperm.xlu0 %239, %v234
    %v241 = vpop.permute.xlu0 %240
    %244 = vset.pattern.permute.xlu0 0
    %245 = vperm.xlu0 %244, %v235
    %v246 = vpop.permute.xlu0 %245
    %249 = vset.pattern.permute.xlu0 0
    %250 = vperm.xlu0 %249, %v236
    %v251 = vpop.permute.xlu0 %250
    %254 = vset.pattern.permute.xlu0 0
    %255 = vperm.xlu0 %254, %v237
    %v256 = vpop.permute.xlu0 %255
    %v262 = vunpack.c.l.b16 %v228
    %v263 = vunpack.c.l.b16 %v229
    %v264 = vunpack.c.l.b16 %v230
    %v265 = vunpack.c.l.b16 %v231
    %v266 = vpack.c.b16 %v263, %v262
    %v267 = vpack.c.b16 %v265, %v264
    %v269 = vsel %vm132, %v266, 0
    %v272 = vsel %vm132, %v267, 0
    %274 = vmatprep.subr.bf16.mxu0 0
    %275 = vmatpush1.bf16.msra.mxu0 0
    %276 = vmatprep.subr.bf16.mxu0 0
    %277 = vmatpush1.bf16.msra.mxu0 0
    %278 = vmatprep.subr.bf16.mxu0 0
    %279 = vmatpush1.bf16.msra.mxu0 0
    %280 = vmatprep.subr.bf16.mxu0 0
    %281 = vmatpush1.bf16.msra.mxu0 0
    %282 = vmatprep.subr.bf16.mxu0 0
    %283 = vmatpush1.bf16.msra.mxu0 0
    %284 = vmatprep.subr.bf16.mxu0 0
    %285 = vmatpush1.bf16.msra.mxu0 0
    %286 = vmatprep.subr.bf16.mxu0 0
    %287 = vmatpush1.bf16.msra.mxu0 %v233
    %288 = vmatprep.subr.bf16.mxu0 0
    %289 = vmatpush1.bf16.msra.mxu0 %v232
    %290 = vmatprep.subr.bf16.mxu0 0
    %291 = vmatpush2.bf16.msra.mxu0 0
    %292 = vmatprep.subr.bf16.mxu0 0
    %293 = vmatpush2.bf16.msra.mxu0 0
    %294 = vmatprep.subr.bf16.mxu0 0
    %295 = vmatpush2.bf16.msra.mxu0 0
    %296 = vmatprep.subr.bf16.mxu0 0
    %297 = vmatpush2.bf16.msra.mxu0 0
    %298 = vmatprep.subr.bf16.mxu0 0
    %299 = vmatpush2.bf16.msra.mxu0 0
    %300 = vmatprep.subr.bf16.mxu0 0
    %301 = vmatpush2.bf16.msra.mxu0 0
    %302 = vmatprep.subr.bf16.mxu0 0
    %303 = vmatpush2.bf16.msra.mxu0 0
    %304 = vmatprep.subr.bf16.mxu0 0
    %305 = vmatpush2.bf16.msra.mxu0 0
    %306 = vmatprep.mubr.bf16.mxu0 0
    %307 = vmatmul.mubr.bf16.gmra.mxu0 %v269
    %v308 = vpop.f32.mrf.mxu0
    %v309 = vadd.f32 %v241, %v308
    %v310 = vpop.f32.mrf.mxu0
    %v311 = vpop.f32.mrf.mxu0
    %v312 = vadd.f32 %v246, %v311
    %v313 = vpop.f32.mrf.mxu0
    %314 = vmatprep.mubr.bf16.mxu0 0
    %315 = vmatmul.mubr.bf16.gmra.mxu0 %v272
    %v316 = vpop.f32.mrf.mxu0
    %v317 = vadd.f32 %v251, %v316
    %v318 = vpop.f32.mrf.mxu0
    %v319 = vpop.f32.mrf.mxu0
    %v320 = vadd.f32 %v256, %v319
    %v321 = vpop.f32.mrf.mxu0
    %322 = vdwg.mxu0
    %vm323 = vcmp.gt.f32.partialorder %v309, 0.0
    %vm324 = vcmp.gt.f32.partialorder %v312, 0.0
    %vm325 = vcmp.gt.f32.partialorder %v317, 0.0
    %vm326 = vcmp.gt.f32.partialorder %v320, 0.0
    %v327 = vmul.f32 %v309, 0.2
    %v328 = vmul.f32 %v312, 0.2
    %v329 = vmul.f32 %v317, 0.2
    %v330 = vmul.f32 %v320, 0.2
    %v331 = vsel %vm323, %v309, %v327
    %v332 = vsel %vm324, %v312, %v328
    %v333 = vsel %vm325, %v317, %v329
    %v334 = vsel %vm326, %v320, %v330
    %v335 = vld [vmem:[%s7] sm:$0x1]
    %v336 = vpack.c.bf16 %v332, %v331
    %v337 = vpack.c.bf16 %v334, %v333
    %v338 = vld [vmem:[#allocation2] sm:$0x1]
    %340 = vset.pattern.permute.xlu0 0
    %341 = vperm.xlu0 %340, %v338
    %v342 = vpop.permute.xlu0 %341
    %v344 = vlaneseq
    %v345 = vshrl.u32 %v344, 7
    %v346 = vsub.s32 0, %v345
    %v347 = vrot.slane %v342, %v346
    %v349 = vsel %vm132, %v335, 0
    %351 = vmatprep.subr.bf16.mxu0 0
    %352 = vmatpush1.bf16.msra.mxu0 0
    %353 = vmatprep.subr.bf16.mxu0 0
    %354 = vmatpush1.bf16.msra.mxu0 0
    %355 = vmatprep.subr.bf16.mxu0 0
    %356 = vmatpush1.bf16.msra.mxu0 0
    %357 = vmatprep.subr.bf16.mxu0 0
    %358 = vmatpush1.bf16.msra.mxu0 0
    %359 = vmatprep.subr.bf16.mxu0 0
    %360 = vmatpush1.bf16.msra.mxu0 0
    %361 = vmatprep.subr.bf16.mxu0 0
    %362 = vmatpush1.bf16.msra.mxu0 0
    %363 = vmatprep.subr.bf16.mxu0 0
    %364 = vmatpush1.bf16.msra.mxu0 %v337
    %365 = vmatprep.subr.bf16.mxu0 0
    %366 = vmatpush1.bf16.msra.mxu0 %v336
    %367 = vmatprep.subr.bf16.mxu0 0
    %368 = vmatpush2.bf16.msra.mxu0 0
    %369 = vmatprep.subr.bf16.mxu0 0
    %370 = vmatpush2.bf16.msra.mxu0 0
    %371 = vmatprep.subr.bf16.mxu0 0
    %372 = vmatpush2.bf16.msra.mxu0 0
    %373 = vmatprep.subr.bf16.mxu0 0
    %374 = vmatpush2.bf16.msra.mxu0 0
    %375 = vmatprep.subr.bf16.mxu0 0
    %376 = vmatpush2.bf16.msra.mxu0 0
    %377 = vmatprep.subr.bf16.mxu0 0
    %378 = vmatpush2.bf16.msra.mxu0 0
    %379 = vmatprep.subr.bf16.mxu0 0
    %380 = vmatpush2.bf16.msra.mxu0 0
    %381 = vmatprep.subr.bf16.mxu0 0
    %382 = vmatpush2.bf16.msra.mxu0 0
    %383 = vmatprep.mubr.bf16.mxu0 0
    %384 = vmatmul.mubr.bf16.gmra.mxu0 %v349
    %v385 = vpop.f32.mrf.mxu0
    %v386 = vadd.f32 %v347, %v385
    %v387 = vpop.f32.mrf.mxu0
    %v388 = vpop.f32.mrf.mxu0
    %v389 = vpop.f32.mrf.mxu0
    %390 = vdwg.mxu0
    %vm391 = vcmask 8192
    %392 = vst.msk [vmem:[#allocation3] sm:$0x1] %vm391, %v386
    // Predicated region
    $region38: #{tpu_custom_call.1} parent=1 // pred_check
      _
    $region39: #{tpu_custom_call.1} parent=1 // pred_check_branch
      %394 = sbr.rel (0) target = $region41
    $region40: #{tpu_custom_call.1} parent=1 // pred_region
      %s396 = ssub.s32 16, 16
      %397 = vsyncadd [#allocation4], %s396
      %s399 = sshll.u32 [#allocation3], 4
      %s400 = int_to_ptr.vmem [resolvable:$true] %s399
      %402 = dma.vmem_to_hbm [thread:$0]  %s400, 16, %s9, [#allocation4]
    $region41: #{tpu_custom_call.1} parent=1 // pred_fallthru
      _
    // Predicated region
    $region42: #{tpu_custom_call.1} parent=1 // pred_check
      _
    $region43: #{tpu_custom_call.1} parent=1 // pred_check_branch
      %404 = sbr.rel (0) target = $region45
    $region44: #{tpu_custom_call.1} parent=1 // pred_region
      %405 = dma.done [#allocation4], 16
    $region45: #{tpu_custom_call.1} parent=1 // pred_fallthru
      _
    %406 = vsyncpa [#allocation4], 1

</llo_original>
